<compile_context>
chip_gen: v5e
topology: v5e:2x2
jax: 0.10.0
libtpu: 0.0.40
codegen_flags: <defaults>
</compile_context>

<pallas_src>
import jax
import jax.numpy as jnp
from jax.experimental import pallas as pl
from jax.experimental.pallas import tpu as pltpu


def value_net_kernel(x_ref, cmd_ref, w1_ref, b1_ref, w2_ref, b2_ref,
                     w3_ref, b3_ref, out_ref):
    # fc1: bf16 MXU, f32 accumulate; bias + ReLU on the VPU in f32.
    h1 = jnp.dot(x_ref[...], w1_ref[...], preferred_element_type=jnp.float32)
    h1 = jnp.maximum(h1 + b1_ref[...], 0.0)
    # fc2: bf16 MXU, f32 accumulate.
    h2 = jnp.dot(h1.astype(jnp.bfloat16), w2_ref[...],
                 preferred_element_type=jnp.float32)
    h2 = jnp.maximum(h2 + b2_ref[...], 0.0)
    # Three 64->1 heads fused as one 64->3 bf16 matmul.
    # Columns = (left, straight, right); bias add stays f32.
    heads = (jnp.dot(h2.astype(jnp.bfloat16), w3_ref[...],
                     preferred_element_type=jnp.float32) + b3_ref[...])
    # torch.stack(dim=0)+gather(dim=0, command) == pick column cmd[b] per row.
    # Transpose (TB,3)->(3,TB) on the XLU so the select and the store happen in
    # the lane-dense layout (full 128-lane vregs, unmasked vst).
    heads_t = jnp.transpose(heads)                     # (3, TB) f32
    cmd = cmd_ref[...]                                 # (1, TB) int32
    out = jnp.where(cmd == 0, heads_t[0:1, :],
                    jnp.where(cmd == 1, heads_t[1:2, :], heads_t[2:3, :]))
    out_ref[...] = out                                 # (1, TB) f32, lane-dense


def _choose_tb(B, obs_dim, *, max_tb=4096, min_tiles=2, align=256):
    """Pick the batch tile TB.

    - Big tiles amortize the ~0.35 us per-grid-step overhead.
    - Multiple of `align` (256) keeps MXU M passes full and lane stores dense
      (also a multiple of 128 for v5e).
    - For large B, at least `min_tiles` tiles so v7x's two TensorCores both get
      work (the batch grid axis is marked "parallel").
    - Capped by a VMEM budget counting the double-buffered x/cmd/out tiles plus
      the f32 h1/h2 intermediates, so it stays well under the 32 MiB scoped
      default on v7x (no explicit vmem_limit_bytes needed).
    """
    resident = 2 * 2 * (obs_dim * 64 + 64 * 64 + 64 * 3) + 4 * (64 + 64 + 3)
    per_row = (2 * 2 * obs_dim      # x tile, bf16, double-buffered
               + 2 * 4 + 2 * 4      # cmd (i32) + out (f32) tiles, double-buffered
               + 2 * 64 * 4         # h1, h2 f32 intermediates
               + 2 * 64 * 2         # bf16 recasts of h1/h2
               + 32)                # heads / heads_t
    budget = 24 * 1024 * 1024
    cap = max(align, ((budget - resident) // per_row) // align * align)
    max_tb = min(max_tb, cap)
    if B <= align:
        # Single tile; blocks equal the full (padded) array dims, so only the
        # sublane (8) alignment on the x tile matters.
        return max(8, ((B + 7) // 8) * 8)
    tiles = max(min_tiles, -(-B // max_tb))
    tb = ((-(-B // tiles) + align - 1) // align) * align
    return min(tb, max_tb)


def value_network_forward(x, command, params, *, max_tb=4096):
    """x: (B, obs_dim) f32, command: (B,) int in {0,1,2}. Returns (B, 1) f32."""
    w1, b1, w2, b2, w3, b3 = params
    B, obs_dim = x.shape

    # bf16 MXU operands (also halves the dominant HBM stream: x), f32 accumulate.
    x_bf = x.astype(jnp.bfloat16)
    w1_bf = w1.astype(jnp.bfloat16)
    w2_bf = w2.astype(jnp.bfloat16)
    w3_bf = w3.astype(jnp.bfloat16)

    # torch.gather would raise on command outside {0,1,2}; clamp defensively.
    cmd = jnp.clip(command.astype(jnp.int32), 0, 2)

    TB = _choose_tb(B, obs_dim, max_tb=max_tb)
    B_pad = -(-B // TB) * TB
    if B_pad != B:
        x_bf = jnp.pad(x_bf, ((0, B_pad - B), (0, 0)))
        cmd = jnp.pad(cmd, (0, B_pad - B))
    num_tiles = B_pad // TB
    # Lane-dense layouts: row t of (num_tiles, TB) is batch rows [t*TB, (t+1)*TB).
    cmd2d = cmd.reshape(num_tiles, TB)

    # Advisory cost model (lane-dense cmd/out now really are 4 B/row).
    flops = 2 * B_pad * (obs_dim * 64 + 64 * 64 + 64 * 3)
    bytes_accessed = (B_pad * obs_dim * 2            # x (bf16)
                      + B_pad * 4 + B_pad * 4        # cmd (i32) + out (f32)
                      + (w1_bf.size + w2_bf.size + w3_bf.size) * 2
                      + (b1.size + b2.size + b3.size) * 4)
    cost = pl.CostEstimate(flops=flops, transcendentals=0,
                           bytes_accessed=bytes_accessed)

    # Tiled along batch; weights/biases VMEM-resident (constant index_map).
    resident = lambda a: pl.BlockSpec(a.shape, lambda i: (0,) * a.ndim)
    out2d = pl.pallas_call(
        value_net_kernel,
        out_shape=jax.ShapeDtypeStruct((num_tiles, TB), jnp.float32),
        grid=(num_tiles,),
        in_specs=[
            pl.BlockSpec((TB, obs_dim), lambda i: (i, 0)),   # x tile
            pl.BlockSpec((1, TB), lambda i: (i, 0)),         # command tile (lane-dense)
            resident(w1_bf), resident(b1),
            resident(w2_bf), resident(b2),
            resident(w3_bf), resident(b3),
        ],
        out_specs=pl.BlockSpec((1, TB), lambda i: (i, 0)),   # lane-dense output
        compiler_params=pltpu.CompilerParams(
            dimension_semantics=("parallel",)),
        cost_estimate=cost,
    )(x_bf, cmd2d, w1_bf, b1, w2_bf, b2, w3_bf, b3)

    # Module semantics: (B, 1) f32.  The reshape/slice is contiguous (free).
    return out2d.reshape(B_pad)[:B].reshape(B, 1)


def init_params(obs_dim, key):
    """Deterministic init mirroring the torch module's init scheme (not its RNG)."""
    k1, k2, k3, kb1, kb2, kb3 = jax.random.split(key, 6)
    # fc1 / fc2: kaiming (he) normal, fan_in -> std = sqrt(2 / fan_in).
    w1 = jax.random.normal(k1, (obs_dim, 64), jnp.float32) * jnp.sqrt(2.0 / obs_dim)
    w2 = jax.random.normal(k2, (64, 64), jnp.float32) * jnp.sqrt(2.0 / 64)
    # heads: xavier uniform per (64 -> 1) head; bound = sqrt(6/(64+1)).
    bound3 = jnp.sqrt(6.0 / (64 + 1))
    w3 = jax.random.uniform(k3, (64, 3), jnp.float32, -bound3, bound3)
    # biases: torch Linear default U(-1/sqrt(fan_in), 1/sqrt(fan_in)).
    b1 = jax.random.uniform(kb1, (1, 64), jnp.float32,
                            -1.0 / jnp.sqrt(obs_dim), 1.0 / jnp.sqrt(obs_dim))
    b2 = jax.random.uniform(kb2, (1, 64), jnp.float32, -1.0 / 8.0, 1.0 / 8.0)
    b3 = jax.random.uniform(kb3, (1, 3), jnp.float32, -1.0 / 8.0, 1.0 / 8.0)
    return w1, b1, w2, b2, w3, b3


def reference_forward(x, command, params):
    """Plain-JAX reference with the exact torch stack/gather semantics.

    Uses the same bf16-operand / f32-accumulate matmuls as the kernel so the
    comparison is apples-to-apples (true torch f32 differs by ~1e-2 rel)."""
    w1, b1, w2, b2, w3, b3 = params
    xb, w1b, w2b, w3b = (x.astype(jnp.bfloat16), w1.astype(jnp.bfloat16),
                         w2.astype(jnp.bfloat16), w3.astype(jnp.bfloat16))
    h = jnp.maximum(jnp.dot(xb, w1b, preferred_element_type=jnp.float32) + b1, 0.0)
    h = jnp.maximum(jnp.dot(h.astype(jnp.bfloat16), w2b,
                            preferred_element_type=jnp.float32) + b2, 0.0)
    heads = jnp.dot(h.astype(jnp.bfloat16), w3b,
                    preferred_element_type=jnp.float32) + b3   # (B, 3)
    stacked = jnp.transpose(heads)[:, :, None]        # (3, B, 1) like torch.stack(dim=0)
    idx = command.reshape(1, -1, 1).astype(jnp.int32)
    picked = jnp.take_along_axis(stacked, idx, axis=0)
    return picked.reshape(-1, 1)


if __name__ == "__main__":
    key = jax.random.PRNGKey(0)
    kx, kc, kp, kx2, kc2 = jax.random.split(key, 5)

    obs_dim = 32
    params = init_params(obs_dim, kp)

    # Small single-tile case.
    B = 8
    x = jax.random.normal(kx, (B, obs_dim), jnp.float32)
    command = jax.random.randint(kc, (B,), 0, 3, jnp.int32)
    out = jax.block_until_ready(value_network_forward(x, command, params))
    ref = reference_forward(x, command, params)
    assert out.shape == (B, 1)
    assert jnp.allclose(out, ref, atol=2e-3, rtol=2e-3), (out, ref)

    # Multi-tile case exercising the lane-dense tiled path (2 tiles -> both
    # TensorCores on v7x; plain sequential grid on v5e/v6e).
    B2 = 600
    x2 = jax.random.normal(kx2, (B2, obs_dim), jnp.float32)
    command2 = jax.random.randint(kc2, (B2,), 0, 3, jnp.int32)
    out2 = jax.block_until_ready(value_network_forward(x2, command2, params))
    ref2 = reference_forward(x2, command2, params)
    assert out2.shape == (B2, 1)
    assert jnp.allclose(out2, ref2, atol=2e-3, rtol=2e-3)

    print("KERNEL_OK")
</pallas_src>

<mosaic_0001>
module attributes {stable_mosaic.version = 11 : i64} {
  func.func @value_net_kernel(%arg0: i32, %arg1: memref<8x32xbf16, #tpu.memory_space<vmem>>, %arg2: memref<1x8xi32, #tpu.memory_space<vmem>>, %arg3: memref<32x64xbf16, #tpu.memory_space<vmem>>, %arg4: memref<1x64xf32, #tpu.memory_space<vmem>>, %arg5: memref<64x64xbf16, #tpu.memory_space<vmem>>, %arg6: memref<1x64xf32, #tpu.memory_space<vmem>>, %arg7: memref<64x3xbf16, #tpu.memory_space<vmem>>, %arg8: memref<1x3xf32, #tpu.memory_space<vmem>>, %arg9: memref<1x8xf32, #tpu.memory_space<vmem>>) attributes {dimension_semantics = [#tpu.dimension_semantics<parallel>], iteration_bounds = array<i64: 1>, scalar_prefetch = 0 : i64, scratch_operands = 0 : i64, tpu.core_type = #tpu.core_type<tc>, window_params = [{transform_indices = @transform_0, window_bounds = array<i64: 8, 32>}, {transform_indices = @transform_1, window_bounds = array<i64: 1, 8>}, {pipeline_mode = #tpu.pipeline_mode<synchronous>, transform_indices = @transform_2, window_bounds = array<i64: 32, 64>}, {pipeline_mode = #tpu.pipeline_mode<synchronous>, transform_indices = @transform_3, window_bounds = array<i64: 1, 64>}, {pipeline_mode = #tpu.pipeline_mode<synchronous>, transform_indices = @transform_4, window_bounds = array<i64: 64, 64>}, {pipeline_mode = #tpu.pipeline_mode<synchronous>, transform_indices = @transform_5, window_bounds = array<i64: 1, 64>}, {pipeline_mode = #tpu.pipeline_mode<synchronous>, transform_indices = @transform_6, window_bounds = array<i64: 64, 3>}, {pipeline_mode = #tpu.pipeline_mode<synchronous>, transform_indices = @transform_7, window_bounds = array<i64: 1, 3>}, {transform_indices = @transform_8, window_bounds = array<i64: 1, 8>}]} {
    %c0 = arith.constant 0 : index
    %c0_0 = arith.constant 0 : index
    %0 = vector.load %arg1[%c0, %c0_0] : memref<8x32xbf16, #tpu.memory_space<vmem>>, vector<8x32xbf16>
    %c0_1 = arith.constant 0 : index
    %c0_2 = arith.constant 0 : index
    %1 = vector.load %arg3[%c0_1, %c0_2] : memref<32x64xbf16, #tpu.memory_space<vmem>>, vector<32x64xbf16>
    %cst = arith.constant dense<0.000000e+00> : vector<8x64xf32>
    %2 = tpu.matmul %0, %1, %cst {dimension_numbers = #tpu.dot_dimension_numbers<[1], [0], [0], [1], [0, 0, 1, 1], [], []>} : vector<8x32xbf16>, vector<32x64xbf16>, vector<8x64xf32> -> vector<8x64xf32>
    %c0_3 = arith.constant 0 : index
    %c0_4 = arith.constant 0 : index
    %3 = vector.load %arg4[%c0_3, %c0_4] : memref<1x64xf32, #tpu.memory_space<vmem>>, vector<1x64xf32>
    %4 = vector.broadcast %3 : vector<1x64xf32> to vector<8x64xf32>
    %5 = arith.addf %2, %4 : vector<8x64xf32>
    %cst_5 = arith.constant 0.000000e+00 : f32
    %6 = vector.broadcast %cst_5 : f32 to vector<8x64xf32>
    %7 = arith.maximumf %5, %6 : vector<8x64xf32>
    %8 = arith.truncf %7 : vector<8x64xf32> to vector<8x64xbf16>
    %c0_6 = arith.constant 0 : index
    %c0_7 = arith.constant 0 : index
    %9 = vector.load %arg5[%c0_6, %c0_7] : memref<64x64xbf16, #tpu.memory_space<vmem>>, vector<64x64xbf16>
    %cst_8 = arith.constant dense<0.000000e+00> : vector<8x64xf32>
    %10 = tpu.matmul %8, %9, %cst_8 {dimension_numbers = #tpu.dot_dimension_numbers<[1], [0], [0], [1], [0, 0, 1, 1], [], []>} : vector<8x64xbf16>, vector<64x64xbf16>, vector<8x64xf32> -> vector<8x64xf32>
    %c0_9 = arith.constant 0 : index
    %c0_10 = arith.constant 0 : index
    %11 = vector.load %arg6[%c0_9, %c0_10] : memref<1x64xf32, #tpu.memory_space<vmem>>, vector<1x64xf32>
    %12 = vector.broadcast %11 : vector<1x64xf32> to vector<8x64xf32>
    %13 = arith.addf %10, %12 : vector<8x64xf32>
    %cst_11 = arith.constant 0.000000e+00 : f32
    %14 = vector.broadcast %cst_11 : f32 to vector<8x64xf32>
    %15 = arith.maximumf %13, %14 : vector<8x64xf32>
    %16 = arith.truncf %15 : vector<8x64xf32> to vector<8x64xbf16>
    %c0_12 = arith.constant 0 : index
    %c0_13 = arith.constant 0 : index
    %17 = vector.load %arg7[%c0_12, %c0_13] : memref<64x3xbf16, #tpu.memory_space<vmem>>, vector<64x3xbf16>
    %cst_14 = arith.constant dense<0.000000e+00> : vector<8x3xf32>
    %18 = tpu.matmul %16, %17, %cst_14 {dimension_numbers = #tpu.dot_dimension_numbers<[1], [0], [0], [1], [0, 0, 1, 1], [], []>} : vector<8x64xbf16>, vector<64x3xbf16>, vector<8x3xf32> -> vector<8x3xf32>
    %c0_15 = arith.constant 0 : index
    %c0_16 = arith.constant 0 : index
    %19 = vector.load %arg8[%c0_15, %c0_16] : memref<1x3xf32, #tpu.memory_space<vmem>>, vector<1x3xf32>
    %20 = vector.broadcast %19 : vector<1x3xf32> to vector<8x3xf32>
    %21 = arith.addf %18, %20 : vector<8x3xf32>
    %22 = tpu.transpose %21, [1, 0] : vector<8x3xf32> -> vector<3x8xf32>
    %c0_17 = arith.constant 0 : index
    %c0_18 = arith.constant 0 : index
    %23 = vector.load %arg2[%c0_17, %c0_18] : memref<1x8xi32, #tpu.memory_space<vmem>>, vector<1x8xi32>
    %c0_i32 = arith.constant 0 : i32
    %24 = vector.broadcast %c0_i32 : i32 to vector<1x8xi32>
    %25 = arith.cmpi eq, %23, %24 : vector<1x8xi32>
    %26 = vector.extract_strided_slice %22 {offsets = [0, 0], sizes = [1, 8], strides = [1, 1]} : vector<3x8xf32> to vector<1x8xf32>
    %c1_i32 = arith.constant 1 : i32
    %27 = vector.broadcast %c1_i32 : i32 to vector<1x8xi32>
    %28 = arith.cmpi eq, %23, %27 : vector<1x8xi32>
    %29 = vector.extract_strided_slice %22 {offsets = [1, 0], sizes = [1, 8], strides = [1, 1]} : vector<3x8xf32> to vector<1x8xf32>
    %30 = vector.extract_strided_slice %22 {offsets = [2, 0], sizes = [1, 8], strides = [1, 1]} : vector<3x8xf32> to vector<1x8xf32>
    %31 = arith.select %28, %29, %30 : vector<1x8xi1>, vector<1x8xf32>
    %32 = arith.select %25, %26, %31 : vector<1x8xi1>, vector<1x8xf32>
    %c0_19 = arith.constant 0 : index
    %c0_20 = arith.constant 0 : index
    %33 = vector.load %arg9[%c0_19, %c0_20] : memref<1x8xf32, #tpu.memory_space<vmem>>, vector<1x8xf32>
    tpu.vector_store %arg9[%c0_19, %c0_20], %32 {strides = array<i32>} : memref<1x8xf32, #tpu.memory_space<vmem>>, vector<1x8xf32>,
    return
  }
  func.func @transform_0(%arg0: i32) -> (i32, i32) {
    %c0_i32 = arith.constant 0 : i32
    %c0_i32_0 = arith.constant 0 : i32
    return %arg0, %c0_i32 : i32, i32
  }
  func.func @transform_1(%arg0: i32) -> (i32, i32) {
    %c0_i32 = arith.constant 0 : i32
    %c0_i32_0 = arith.constant 0 : i32
    return %arg0, %c0_i32 : i32, i32
  }
  func.func @transform_2(%arg0: i32) -> (i32, i32) {
    %c0_i32 = arith.constant 0 : i32
    %c0_i32_0 = arith.constant 0 : i32
    %c0_i32_1 = arith.constant 0 : i32
    return %c0_i32, %c0_i32_0 : i32, i32
  }
  func.func @transform_3(%arg0: i32) -> (i32, i32) {
    %c0_i32 = arith.constant 0 : i32
    %c0_i32_0 = arith.constant 0 : i32
    %c0_i32_1 = arith.constant 0 : i32
    return %c0_i32, %c0_i32_0 : i32, i32
  }
  func.func @transform_4(%arg0: i32) -> (i32, i32) {
    %c0_i32 = arith.constant 0 : i32
    %c0_i32_0 = arith.constant 0 : i32
    %c0_i32_1 = arith.constant 0 : i32
    return %c0_i32, %c0_i32_0 : i32, i32
  }
  func.func @transform_5(%arg0: i32) -> (i32, i32) {
    %c0_i32 = arith.constant 0 : i32
    %c0_i32_0 = arith.constant 0 : i32
    %c0_i32_1 = arith.constant 0 : i32
    return %c0_i32, %c0_i32_0 : i32, i32
  }
  func.func @transform_6(%arg0: i32) -> (i32, i32) {
    %c0_i32 = arith.constant 0 : i32
    %c0_i32_0 = arith.constant 0 : i32
    %c0_i32_1 = arith.constant 0 : i32
    return %c0_i32, %c0_i32_0 : i32, i32
  }
  func.func @transform_7(%arg0: i32) -> (i32, i32) {
    %c0_i32 = arith.constant 0 : i32
    %c0_i32_0 = arith.constant 0 : i32
    %c0_i32_1 = arith.constant 0 : i32
    return %c0_i32, %c0_i32_0 : i32, i32
  }
  func.func @transform_8(%arg0: i32) -> (i32, i32) {
    %c0_i32 = arith.constant 0 : i32
    %c0_i32_0 = arith.constant 0 : i32
    return %arg0, %c0_i32 : i32, i32
  }
}

</mosaic_0001>

<llo_original>
// kernel: tpu_custom_call.1
$region0: #{tpu_custom_call.1}
  #allocation0 [shape = 'u32[]', space=smem, size = 0x4, offset = 0x4, fixed_abs, tag = 'smem constant byte address 0x4 - core index']
  #allocation1 [shape = 'u32[72,128]{1,0:T(1,128)}', space=vmem, size = 0x9000, scoped, tag = 'internal scratch']
  %s0 = inlined_call_operand.vmem [shape: bf16[8,32], index: 0, kind: input, shape index: {}]
  %s1 = inlined_call_operand.hbm [shape: s32[1,8], index: 1, kind: input, shape index: {}]
  %s2 = inlined_call_operand.hbm [shape: bf16[32,64], index: 2, kind: input, shape index: {}]
  %s3 = inlined_call_operand.hbm [shape: f32[1,64], index: 3, kind: input, shape index: {}]
  %s4 = inlined_call_operand.vmem [shape: bf16[64,64], index: 4, kind: input, shape index: {}]
  %s5 = inlined_call_operand.hbm [shape: f32[1,64], index: 5, kind: input, shape index: {}]
  %s6 = inlined_call_operand.vmem [shape: bf16[64,3], index: 6, kind: input, shape index: {}]
  %s7 = inlined_call_operand.vmem [shape: f32[1,3], index: 7, kind: input, shape index: {}]
  %s8 = inlined_call_operand.hbm [shape: f32[1,8], index: 8, kind: output, shape index: {}]
  %s9 = sld [smem:[#allocation0]]
  $region58: #{tpu_custom_call.1} parent=0
    _
  %s11 = ssub.s32 1, %s9
  %s12 = scalar_select 0, %s11, %s9
  $region1: #{tpu_custom_call.1} parent=0
    #allocation2 [shape = 'u8[512]{0}', space=vmem, size = 0x400, scoped, tag = 'input window, operand 1, single buffered']
    #allocation3 [shape = 's32[1]{0}', space=sflag, size = 0x4, scoped, tag = 'scoped memory for tpu_custom_call.1']
    #allocation4 [shape = 's32[1]{0}', space=sflag, size = 0x4, scoped, tag = 'scoped memory for tpu_custom_call.1']
    #allocation5 [shape = 'u8[8192]{0}', space=vmem, size = 0x2000, scoped, tag = 'input window, operand 2, single buffered']
    #allocation6 [shape = 's32[1]{0}', space=sflag, size = 0x4, scoped, tag = 'scoped memory for tpu_custom_call.1']
    #allocation7 [shape = 'u8[512]{0}', space=vmem, size = 0x400, scoped, tag = 'input window, operand 3, single buffered']
    #allocation8 [shape = 'u8[512]{0}', space=vmem, size = 0x400, scoped, tag = 'input window, operand 5, single buffered']
    #allocation9 [shape = 's32[1]{0}', space=sflag, size = 0x4, scoped, tag = 'scoped memory for tpu_custom_call.1']
    #allocation10 [shape = 'u8[512]{0}', space=vmem, size = 0x400, scoped, tag = 'output window, operand 0, single buffered']
    %13 = vsyncpa [#allocation3], 0
    %14 = vsyncpa [#allocation6], 0
    %15 = vsyncpa [#allocation9], 0
    %16 = vsyncpa [#allocation4], 0
    // Predicated region
    $region2: #{tpu_custom_call.1} parent=1 // pred_check
      _
    $region3: #{tpu_custom_call.1} parent=1 // pred_check_branch
      %18 = sbr.rel (0) target = $region5
    $region4: #{tpu_custom_call.1} parent=1 // pred_region
      _
    $region5: #{tpu_custom_call.1} parent=1 // pred_fallthru
      _
    // Predicated region
    $region6: #{tpu_custom_call.1} parent=1 // pred_check
      _
    $region7: #{tpu_custom_call.1} parent=1 // pred_check_branch
      %20 = sbr.rel (0) target = $region9
    $region8: #{tpu_custom_call.1} parent=1 // pred_region
      %22 = vsyncadd [#allocation3], 0
      %s24 = sshll.u32 %s1, 4
      %s25 = int_to_ptr.hbm [resolvable:$true] %s24
      %s26 = sshll.u32 [#allocation2], 4
      %s27 = int_to_ptr.vmem [resolvable:$true] %s26
      %29 = dma.hbm_to_vmem [thread:$0]  %s25, 16, %s27, [#allocation3]
    $region9: #{tpu_custom_call.1} parent=1 // pred_fallthru
      _
    // Predicated region
    $region10: #{tpu_custom_call.1} parent=1 // pred_check
      _
    $region11: #{tpu_custom_call.1} parent=1 // pred_check_branch
      %31 = sbr.rel (0) target = $region13
    $region12: #{tpu_custom_call.1} parent=1 // pred_region
      %33 = vsyncadd [#allocation6], 0
      %s34 = sshll.u32 %s2, 4
      %s35 = int_to_ptr.hbm [resolvable:$true] %s34
      %s36 = sshll.u32 [#allocation5], 4
      %s37 = int_to_ptr.vmem [resolvable:$true] %s36
      %42 = dma.hbm_to_vmem [thread:$0]  %s35, 256, %s37, [#allocation6], 64, 64, 4
    $region13: #{tpu_custom_call.1} parent=1 // pred_fallthru
      _
    // Predicated region
    $region14: #{tpu_custom_call.1} parent=1 // pred_check
      _
    $region15: #{tpu_custom_call.1} parent=1 // pred_check_branch
      %44 = sbr.rel (0) target = $region17
    $region16: #{tpu_custom_call.1} parent=1 // pred_region
      %46 = vsyncadd [#allocation6], 0
      %s48 = sshll.u32 %s3, 4
      %s49 = int_to_ptr.hbm [resolvable:$true] %s48
      %s50 = sshll.u32 [#allocation7], 4
      %s51 = int_to_ptr.vmem [resolvable:$true] %s50
      %53 = dma.hbm_to_vmem [thread:$0]  %s49, 16, %s51, [#allocation6]
    $region17: #{tpu_custom_call.1} parent=1 // pred_fallthru
      _
    // Predicated region
    $region18: #{tpu_custom_call.1} parent=1 // pred_check
      _
    $region19: #{tpu_custom_call.1} parent=1 // pred_check_branch
      %55 = sbr.rel (0) target = $region21
    $region20: #{tpu_custom_call.1} parent=1 // pred_region
      _
    $region21: #{tpu_custom_call.1} parent=1 // pred_fallthru
      _
    // Predicated region
    $region22: #{tpu_custom_call.1} parent=1 // pred_check
      _
    $region23: #{tpu_custom_call.1} parent=1 // pred_check_branch
      %57 = sbr.rel (0) target = $region25
    $region24: #{tpu_custom_call.1} parent=1 // pred_region
      %59 = vsyncadd [#allocation9], 0
      %s61 = sshll.u32 %s5, 4
      %s62 = int_to_ptr.hbm [resolvable:$true] %s61
      %s63 = sshll.u32 [#allocation8], 4
      %s64 = int_to_ptr.vmem [resolvable:$true] %s63
      %66 = dma.hbm_to_vmem [thread:$0]  %s62, 16, %s64, [#allocation9]
    $region25: #{tpu_custom_call.1} parent=1 // pred_fallthru
      _
    // Predicated region
    $region26: #{tpu_custom_call.1} parent=1 // pred_check
      _
    $region27: #{tpu_custom_call.1} parent=1 // pred_check_branch
      %68 = sbr.rel (0) target = $region29
    $region28: #{tpu_custom_call.1} parent=1 // pred_region
      _
    $region29: #{tpu_custom_call.1} parent=1 // pred_fallthru
      _
    // Predicated region
    $region30: #{tpu_custom_call.1} parent=1 // pred_check
      _
    $region31: #{tpu_custom_call.1} parent=1 // pred_check_branch
      %70 = sbr.rel (0) target = $region33
    $region32: #{tpu_custom_call.1} parent=1 // pred_region
      _
    $region33: #{tpu_custom_call.1} parent=1 // pred_fallthru
      _
    // Predicated region
    $region34: #{tpu_custom_call.1} parent=1 // pred_check
      _
    $region35: #{tpu_custom_call.1} parent=1 // pred_check_branch
      %72 = sbr.rel (0) target = $region37
    $region36: #{tpu_custom_call.1} parent=1 // pred_region
      %74 = dma.done [#allocation3], 16
    $region37: #{tpu_custom_call.1} parent=1 // pred_fallthru
      _
    // Predicated region
    $region38: #{tpu_custom_call.1} parent=1 // pred_check
      _
    $region39: #{tpu_custom_call.1} parent=1 // pred_check_branch
      %76 = sbr.rel (0) target = $region41
    $region40: #{tpu_custom_call.1} parent=1 // pred_region
      %78 = dma.done [#allocation6], 256
    $region41: #{tpu_custom_call.1} parent=1 // pred_fallthru
      _
    // Predicated region
    $region42: #{tpu_custom_call.1} parent=1 // pred_check
      _
    $region43: #{tpu_custom_call.1} parent=1 // pred_check_branch
      %80 = sbr.rel (0) target = $region45
    $region44: #{tpu_custom_call.1} parent=1 // pred_region
      %82 = dma.done [#allocation6], 16
    $region45: #{tpu_custom_call.1} parent=1 // pred_fallthru
      _
    // Predicated region
    $region46: #{tpu_custom_call.1} parent=1 // pred_check
      _
    $region47: #{tpu_custom_call.1} parent=1 // pred_check_branch
      %84 = sbr.rel (0) target = $region49
    $region48: #{tpu_custom_call.1} parent=1 // pred_region
      %86 = dma.done [#allocation9], 16
    $region49: #{tpu_custom_call.1} parent=1 // pred_fallthru
      _
    %v88 = vld [vmem:[%s0] sm:$0xf]
    %v89 = vld [vmem:[#allocation5] sm:$0xf]
    %v90 = vld [vmem:[#allocation5 + $0x4] sm:$0xf]
    %v91 = vld [vmem:[#allocation5 + $0x8] sm:$0xf]
    %v92 = vld [vmem:[#allocation5 + $0xc] sm:$0xf]
    %v93 = vld [vmem:[#allocation7] sm:$0x1]
    %v95 = vperm.slane %v93, 0
    %v101 = vunpack.c.l.b16 %v89
    %v102 = vunpack.c.l.b16 %v90
    %v103 = vunpack.c.l.b16 %v91
    %v104 = vunpack.c.l.b16 %v92
    %v105 = vpack.c.b16 %v102, %v101
    %v106 = vpack.c.b16 %v104, %v103
    %vm109 = vcmask 261120
    %v111 = vsel %vm109, %v88, 0
    %113 = vmatpush.bf16.msra.mxu0 0
    %114 = vmatpush.bf16.msra.mxu0 0
    %115 = vmatpush.bf16.msra.mxu0 0
    %116 = vmatpush.bf16.msra.mxu0 0
    %117 = vmatpush.bf16.msra.mxu0 0
    %118 = vmatpush.bf16.msra.mxu0 0
    %119 = vmatpush.bf16.msra.mxu0 %v106
    %120 = vmatpush.bf16.msra.mxu0 %v105
    %121 = vmatmul.bf16.gmra.mxu0 %v111
    %v122 = vpop.f32.mrf.mxu0
    %v123 = vadd.f32 %v95, %v122
    %v124 = vpop.f32.mrf.mxu0
    %125 = vdwg.mxu0
    %v126 = vmax.f32 %v123, 0.0
    %v127 = vpack.c.bf16 %v126, %v126
    %v128 = vld [vmem:[%s4] sm:$0xf]
    %v129 = vld [vmem:[%s4 + $0x4] sm:$0xf]
    %v130 = vld [vmem:[%s4 + $0x8] sm:$0xf]
    %v131 = vld [vmem:[%s4 + $0xc] sm:$0xf]
    %v132 = vld [vmem:[%s4 + $0x10] sm:$0xf]
    %v133 = vld [vmem:[%s4 + $0x14] sm:$0xf]
    %v134 = vld [vmem:[%s4 + $0x18] sm:$0xf]
    %v135 = vld [vmem:[%s4 + $0x1c] sm:$0xf]
    %v136 = vld [vmem:[#allocation8] sm:$0x1]
    %v138 = vperm.slane %v136, 0
    %v148 = vunpack.c.l.b16 %v128
    %v149 = vunpack.c.l.b16 %v129
    %v150 = vunpack.c.l.b16 %v130
    %v151 = vunpack.c.l.b16 %v131
    %v152 = vunpack.c.l.b16 %v132
    %v153 = vunpack.c.l.b16 %v133
    %v154 = vunpack.c.l.b16 %v134
    %v155 = vunpack.c.l.b16 %v135
    %v156 = vpack.c.b16 %v149, %v148
    %v157 = vpack.c.b16 %v151, %v150
    %v158 = vpack.c.b16 %v153, %v152
    %v159 = vpack.c.b16 %v155, %v154
    %vm164 = vcmask 523264
    %v166 = vsel %vm164, %v127, 0
    %168 = vmatpush.bf16.msra.mxu0 0
    %169 = vmatpush.bf16.msra.mxu0 0
    %170 = vmatpush.bf16.msra.mxu0 0
    %171 = vmatpush.bf16.msra.mxu0 0
    %172 = vmatpush.bf16.msra.mxu0 %v159
    %173 = vmatpush.bf16.msra.mxu0 %v158
    %174 = vmatpush.bf16.msra.mxu0 %v157
    %175 = vmatpush.bf16.msra.mxu0 %v156
    %176 = vmatmul.bf16.gmra.mxu0 %v166
    %v177 = vpop.f32.mrf.mxu0
    %v178 = vadd.f32 %v138, %v177
    %v179 = vpop.f32.mrf.mxu0
    %180 = vdwg.mxu0
    %v181 = vmax.f32 %v178, 0.0
    %v182 = vpack.c.bf16 %v181, %v181
    %v183 = vld [vmem:[%s6] sm:$0xf]
    %v184 = vld [vmem:[%s6 + $0x4] sm:$0xf]
    %v185 = vld [vmem:[%s6 + $0x8] sm:$0xf]
    %v186 = vld [vmem:[%s6 + $0xc] sm:$0xf]
    %v187 = vld [vmem:[%s6 + $0x10] sm:$0xf]
    %v188 = vld [vmem:[%s6 + $0x14] sm:$0xf]
    %v189 = vld [vmem:[%s6 + $0x18] sm:$0xf]
    %v190 = vld [vmem:[%s6 + $0x1c] sm:$0xf]
    %v191 = vld [vmem:[%s7] sm:$0x1]
    %v193 = vperm.slane %v191, 0
    %v203 = vunpack.c.l.b16 %v183
    %v204 = vunpack.c.l.b16 %v184
    %v205 = vunpack.c.l.b16 %v185
    %v206 = vunpack.c.l.b16 %v186
    %v207 = vunpack.c.l.b16 %v187
    %v208 = vunpack.c.l.b16 %v188
    %v209 = vunpack.c.l.b16 %v189
    %v210 = vunpack.c.l.b16 %v190
    %v211 = vpack.c.b16 %v204, %v203
    %v212 = vpack.c.b16 %v206, %v205
    %v213 = vpack.c.b16 %v208, %v207
    %v214 = vpack.c.b16 %v210, %v209
    %v220 = vsel %vm164, %v182, 0
    %222 = vmatpush.bf16.msra.mxu0 0
    %223 = vmatpush.bf16.msra.mxu0 0
    %224 = vmatpush.bf16.msra.mxu0 0
    %225 = vmatpush.bf16.msra.mxu0 0
    %226 = vmatpush.bf16.msra.mxu0 %v214
    %227 = vmatpush.bf16.msra.mxu0 %v213
    %228 = vmatpush.bf16.msra.mxu0 %v212
    %229 = vmatpush.bf16.msra.mxu0 %v211
    %230 = vmatmul.bf16.gmra.mxu0 %v220
    %v231 = vpop.f32.mrf.mxu0
    %v232 = vadd.f32 %v193, %v231
    %v233 = vpop.f32.mrf.mxu0
    %234 = vdwg.mxu0
    %235 = vxpose.xlu0.b32.start [1/16] %v232, 128
    %236 = vxpose.xlu0.b32.cont [2/16] 0.0, 128
    %237 = vxpose.xlu0.b32.cont [3/16] 0.0, 128
    %238 = vxpose.xlu0.b32.cont [4/16] 0.0, 128
    %239 = vxpose.xlu0.b32.cont [5/16] 0.0, 128
    %240 = vxpose.xlu0.b32.cont [6/16] 0.0, 128
    %241 = vxpose.xlu0.b32.cont [7/16] 0.0, 128
    %242 = vxpose.xlu0.b32.cont [8/16] 0.0, 128
    %243 = vxpose.xlu0.b32.cont [9/16] 0.0, 128
    %244 = vxpose.xlu0.b32.cont [10/16] 0.0, 128
    %245 = vxpose.xlu0.b32.cont [11/16] 0.0, 128
    %246 = vxpose.xlu0.b32.cont [12/16] 0.0, 128
    %247 = vxpose.xlu0.b32.cont [13/16] 0.0, 128
    %248 = vxpose.xlu0.b32.cont [14/16] 0.0, 128
    %249 = vxpose.xlu0.b32.cont [15/16] 0.0, 128
    %250 = vxpose.xlu0.b32.end [16/16] 0.0, 128
    %v251 = vpop.trf.xlu0
    %v252 = vpop.trf.xlu0
    %v253 = vpop.trf.xlu0
    %v254 = vpop.trf.xlu0
    %v255 = vpop.trf.xlu0
    %v256 = vpop.trf.xlu0
    %v257 = vpop.trf.xlu0
    %v258 = vpop.trf.xlu0
    %v259 = vpop.trf.xlu0
    %v260 = vpop.trf.xlu0
    %v261 = vpop.trf.xlu0
    %v262 = vpop.trf.xlu0
    %v263 = vpop.trf.xlu0
    %v264 = vpop.trf.xlu0
    %v265 = vpop.trf.xlu0
    %v266 = vpop.trf.xlu0
    %v267 = vld [vmem:[#allocation2] sm:$0x1]
    %vm268 = vcmp.eq.s32.totalorder %v267, 0
    %vm269 = vcmp.eq.s32.totalorder %v267, 1
    %271 = vst [vmem:[#allocation1] sm:$0xff] %v251
    %s272 = scalar_lea.vmem [#allocation1], 1
    %v273 = vld [vmem:[%s272] ss:$9 sm:$0xff]
    %275 = vst [vmem:[#allocation1] sm:$0xff] %v251
    %s276 = scalar_lea.vmem [#allocation1], 2
    %v277 = vld [vmem:[%s276] ss:$9 sm:$0xff]
    %v279 = vsel %vm269, %v273, %v277
    %v280 = vsel %vm268, %v251, %v279
    %vm281 = vcmask 57344
    %282 = vst.msk [vmem:[#allocation10] sm:$0x1] %vm281, %v280
    // Predicated region
    $region50: #{tpu_custom_call.1} parent=1 // pred_check
      _
    $region51: #{tpu_custom_call.1} parent=1 // pred_check_branch
      %284 = sbr.rel (0) target = $region53
    $region52: #{tpu_custom_call.1} parent=1 // pred_region
      %286 = vsyncadd [#allocation4], 0
      %s288 = sshll.u32 [#allocation10], 4
      %s289 = int_to_ptr.vmem [resolvable:$true] %s288
      %s290 = sshll.u32 %s8, 4
      %s291 = int_to_ptr.hbm [resolvable:$true] %s290
      %293 = dma.vmem_to_hbm [thread:$0]  %s289, 16, %s291, [#allocation4]
    $region53: #{tpu_custom_call.1} parent=1 // pred_fallthru
      _
    // Predicated region
    $region54: #{tpu_custom_call.1} parent=1 // pred_check
      _
    $region55: #{tpu_custom_call.1} parent=1 // pred_check_branch
      %295 = sbr.rel (0) target = $region57
    $region56: #{tpu_custom_call.1} parent=1 // pred_region
      %297 = dma.done [#allocation4], 16
    $region57: #{tpu_custom_call.1} parent=1 // pred_fallthru
      _
    %298 = vsyncpa [#allocation3], 1
    %299 = vsyncpa [#allocation6], 1
    %300 = vsyncpa [#allocation9], 1
    %301 = vsyncpa [#allocation4], 1

</llo_original>
